<compile_context>
chip_gen: v5e
topology: v5e:2x2
jax: 0.10.0
libtpu: 0.0.40
codegen_flags: <defaults>
</compile_context>

<pallas_src>
import jax
import jax.numpy as jnp
from jax.experimental import pallas as pl
from jax.experimental.pallas import tpu as pltpu


def _conv_bn_kernel(x_ref, w_ref, gamma_ref, beta_ref, o_ref):
    # x_ref:     [Cin,  M]   bf16   (M = H*W, N == 1)
    # w_ref:     [Cout, Cin] bf16
    # gamma_ref: [Cout, 1]   f32
    # beta_ref:  [Cout, 1]   f32
    # o_ref:     [Cout, M]   f32
    eps = 1e-3

    # 1x1 conv == single bf16 MXU matmul with f32 accumulation:
    # [Cout, Cin] @ [Cin, M] -> [Cout, M] (f32).
    y = jnp.dot(w_ref[...], x_ref[...], preferred_element_type=jnp.float32)

    # BatchNorm (training-mode forward): biased batch statistics over M per
    # output channel, one pass (sum and sum-of-squares), all in f32.
    # Lane padding of M=196 -> 256 is masked out of the reductions by Mosaic.
    inv_m = 1.0 / y.shape[-1]
    mean = jnp.sum(y, axis=-1, keepdims=True) * inv_m             # [Cout, 1]
    mean_sq = jnp.sum(y * y, axis=-1, keepdims=True) * inv_m      # [Cout, 1]
    var = jnp.maximum(mean_sq - mean * mean, 0.0)                 # biased var

    inv_std = jax.lax.rsqrt(var + eps)                            # [Cout, 1]
    scale = gamma_ref[...] * inv_std                              # [Cout, 1]
    shift = beta_ref[...] - mean * scale                          # [Cout, 1]

    # Single store: normalize directly from the register-resident conv result
    # (no stash/reload of a full-size temporary through VMEM).
    o_ref[...] = (y * scale + shift).astype(o_ref.dtype)


def conv2d_1x1_batchnorm(x_nchw, w_oihw, gamma, beta):
    """x_nchw: [N, Cin, H, W], w_oihw: [Cout, Cin, 1, 1], gamma/beta: [Cout]."""
    n, cin, h, wd = x_nchw.shape
    cout = w_oihw.shape[0]

    # TODO(synk): N > 1 would need a batch grid axis with sum/sumsq
    # accumulation for the BN stats; the module spec uses N = 1, so we take
    # the zero-copy [Cin, H*W] view of NCHW here.
    assert n == 1, "kernel layout assumes batch size 1 (as in the module spec)"

    m = h * wd
    # bf16 matmul inputs: halves input DMA and avoids multi-pass f32 MXU
    # decomposition. BN stats / output remain f32.
    x2d = x_nchw.reshape(cin, m).astype(jnp.bfloat16)       # free view + cast
    w2d = w_oihw.reshape(cout, cin).astype(jnp.bfloat16)    # free view + cast
    gamma2d = gamma.reshape(cout, 1).astype(jnp.float32)
    beta2d = beta.reshape(cout, 1).astype(jnp.float32)

    out2d = pl.pallas_call(
        _conv_bn_kernel,
        out_shape=jax.ShapeDtypeStruct((cout, m), jnp.float32),
        grid=(1,),
        in_specs=[
            pl.BlockSpec((cin, m), lambda i: (0, 0)),
            pl.BlockSpec((cout, cin), lambda i: (0, 0)),
            pl.BlockSpec((cout, 1), lambda i: (0, 0)),
            pl.BlockSpec((cout, 1), lambda i: (0, 0)),
        ],
        out_specs=pl.BlockSpec((cout, m), lambda i: (0, 0)),
        compiler_params=pltpu.CompilerParams(
            dimension_semantics=("arbitrary",)),
    )(x2d, w2d, gamma2d, beta2d)

    # [Cout, M] -> [1, Cout, H, W] is a free (contiguous) view.
    return out2d.reshape(n, cout, h, wd)


if __name__ == "__main__":
    key = jax.random.PRNGKey(0)
    k_x, k_w = jax.random.split(key)

    # Shapes implied by the module: x80 ~ [1, 80, 14, 14], Conv2d(80, 200, 1x1)
    N, CIN, H, W = 1, 80, 14, 14
    COUT = 200

    x = jax.random.normal(k_x, (N, CIN, H, W), dtype=jnp.float32)
    # Conv weight (PyTorch shape [Cout, Cin, 1, 1]), bias=False
    w = jax.random.normal(k_w, (COUT, CIN, 1, 1), dtype=jnp.float32) * (1.0 / jnp.sqrt(CIN))
    # BatchNorm affine params at PyTorch default init
    gamma = jnp.ones((COUT,), dtype=jnp.float32)
    beta = jnp.zeros((COUT,), dtype=jnp.float32)

    out = conv2d_1x1_batchnorm(x, w, gamma, beta)
    out = jax.block_until_ready(out)

    assert out.shape == (N, COUT, H, W), out.shape
    assert out.dtype == jnp.float32
    print("KERNEL_OK")
</pallas_src>

<mosaic_0001>
module attributes {stable_mosaic.version = 11 : i64} {
  func.func @_conv_bn_kernel(%arg0: i32, %arg1: memref<80x196xbf16, #tpu.memory_space<vmem>>, %arg2: memref<200x80xbf16, #tpu.memory_space<vmem>>, %arg3: memref<200x1xf32, #tpu.memory_space<vmem>>, %arg4: memref<200x1xf32, #tpu.memory_space<vmem>>, %arg5: memref<200x196xf32, #tpu.memory_space<vmem>>) attributes {dimension_semantics = [#tpu.dimension_semantics<arbitrary>], iteration_bounds = array<i64: 1>, scalar_prefetch = 0 : i64, scratch_operands = 0 : i64, tpu.core_type = #tpu.core_type<tc>, window_params = [{pipeline_mode = #tpu.pipeline_mode<synchronous>, transform_indices = @transform_0, window_bounds = array<i64: 80, 196>}, {pipeline_mode = #tpu.pipeline_mode<synchronous>, transform_indices = @transform_1, window_bounds = array<i64: 200, 80>}, {pipeline_mode = #tpu.pipeline_mode<synchronous>, transform_indices = @transform_2, window_bounds = array<i64: 200, 1>}, {pipeline_mode = #tpu.pipeline_mode<synchronous>, transform_indices = @transform_3, window_bounds = array<i64: 200, 1>}, {pipeline_mode = #tpu.pipeline_mode<synchronous>, transform_indices = @transform_4, window_bounds = array<i64: 200, 196>}]} {
    %c0 = arith.constant 0 : index
    %c0_0 = arith.constant 0 : index
    %0 = vector.load %arg2[%c0, %c0_0] : memref<200x80xbf16, #tpu.memory_space<vmem>>, vector<200x80xbf16>
    %c0_1 = arith.constant 0 : index
    %c0_2 = arith.constant 0 : index
    %1 = vector.load %arg1[%c0_1, %c0_2] : memref<80x196xbf16, #tpu.memory_space<vmem>>, vector<80x196xbf16>
    %cst = arith.constant dense<0.000000e+00> : vector<200x196xf32>
    %2 = tpu.matmul %0, %1, %cst {dimension_numbers = #tpu.dot_dimension_numbers<[1], [0], [0], [1], [0, 0, 1, 1], [], []>} : vector<200x80xbf16>, vector<80x196xbf16>, vector<200x196xf32> -> vector<200x196xf32>
    %cst_3 = arith.constant dense<0.000000e+00> : vector<200xf32>
    %3 = vector.multi_reduction <add>, %2, %cst_3 [1] : vector<200x196xf32> to vector<200xf32>
    %4 = vector.shape_cast %3 : vector<200xf32> to vector<200x1xf32>
    %cst_4 = arith.constant 0.00510204071 : f32
    %5 = vector.broadcast %cst_4 : f32 to vector<200x1xf32>
    %6 = arith.mulf %4, %5 : vector<200x1xf32>
    %7 = arith.mulf %2, %2 : vector<200x196xf32>
    %cst_5 = arith.constant dense<0.000000e+00> : vector<200xf32>
    %8 = vector.multi_reduction <add>, %7, %cst_5 [1] : vector<200x196xf32> to vector<200xf32>
    %9 = vector.shape_cast %8 : vector<200xf32> to vector<200x1xf32>
    %cst_6 = arith.constant 0.00510204071 : f32
    %10 = vector.broadcast %cst_6 : f32 to vector<200x1xf32>
    %11 = arith.mulf %9, %10 : vector<200x1xf32>
    %12 = arith.mulf %6, %6 : vector<200x1xf32>
    %13 = arith.subf %11, %12 : vector<200x1xf32>
    %cst_7 = arith.constant 0.000000e+00 : f32
    %14 = vector.broadcast %cst_7 : f32 to vector<200x1xf32>
    %15 = arith.maximumf %13, %14 : vector<200x1xf32>
    %cst_8 = arith.constant 1.000000e-03 : f32
    %16 = vector.broadcast %cst_8 : f32 to vector<200x1xf32>
    %17 = arith.addf %15, %16 : vector<200x1xf32>
    %18 = math.rsqrt %17 : vector<200x1xf32>
    %c0_9 = arith.constant 0 : index
    %c0_10 = arith.constant 0 : index
    %19 = vector.load %arg3[%c0_9, %c0_10] : memref<200x1xf32, #tpu.memory_space<vmem>>, vector<200x1xf32>
    %20 = arith.mulf %19, %18 : vector<200x1xf32>
    %c0_11 = arith.constant 0 : index
    %c0_12 = arith.constant 0 : index
    %21 = vector.load %arg4[%c0_11, %c0_12] : memref<200x1xf32, #tpu.memory_space<vmem>>, vector<200x1xf32>
    %22 = arith.mulf %6, %20 : vector<200x1xf32>
    %23 = arith.subf %21, %22 : vector<200x1xf32>
    %24 = vector.broadcast %20 : vector<200x1xf32> to vector<200x196xf32>
    %25 = arith.mulf %2, %24 : vector<200x196xf32>
    %26 = vector.broadcast %23 : vector<200x1xf32> to vector<200x196xf32>
    %27 = arith.addf %25, %26 : vector<200x196xf32>
    %c0_13 = arith.constant 0 : index
    %c0_14 = arith.constant 0 : index
    %28 = vector.load %arg5[%c0_13, %c0_14] : memref<200x196xf32, #tpu.memory_space<vmem>>, vector<200x196xf32>
    tpu.vector_store %arg5[%c0_13, %c0_14], %27 {strides = array<i32>} : memref<200x196xf32, #tpu.memory_space<vmem>>, vector<200x196xf32>,
    return
  }
  func.func @transform_0(%arg0: i32) -> (i32, i32) {
    %c0_i32 = arith.constant 0 : i32
    %c0_i32_0 = arith.constant 0 : i32
    %c0_i32_1 = arith.constant 0 : i32
    return %c0_i32, %c0_i32_0 : i32, i32
  }
  func.func @transform_1(%arg0: i32) -> (i32, i32) {
    %c0_i32 = arith.constant 0 : i32
    %c0_i32_0 = arith.constant 0 : i32
    %c0_i32_1 = arith.constant 0 : i32
    return %c0_i32, %c0_i32_0 : i32, i32
  }
  func.func @transform_2(%arg0: i32) -> (i32, i32) {
    %c0_i32 = arith.constant 0 : i32
    %c0_i32_0 = arith.constant 0 : i32
    %c0_i32_1 = arith.constant 0 : i32
    return %c0_i32, %c0_i32_0 : i32, i32
  }
  func.func @transform_3(%arg0: i32) -> (i32, i32) {
    %c0_i32 = arith.constant 0 : i32
    %c0_i32_0 = arith.constant 0 : i32
    %c0_i32_1 = arith.constant 0 : i32
    return %c0_i32, %c0_i32_0 : i32, i32
  }
  func.func @transform_4(%arg0: i32) -> (i32, i32) {
    %c0_i32 = arith.constant 0 : i32
    %c0_i32_0 = arith.constant 0 : i32
    %c0_i32_1 = arith.constant 0 : i32
    return %c0_i32, %c0_i32_0 : i32, i32
  }
}

</mosaic_0001>

<llo_original>
// kernel: tpu_custom_call.1
$region0: #{tpu_custom_call.1}
  #allocation0 [shape = 'u32[]', space=smem, size = 0x4, offset = 0x4, fixed_abs, tag = 'smem constant byte address 0x4 - core index']
  #allocation1 [shape = 'u32[72,128]{1,0:T(1,128)}', space=vmem, size = 0x9000, scoped, tag = 'internal scratch']
  %s0 = inlined_call_operand.vmem [shape: bf16[80,196], index: 0, kind: input, shape index: {}]
  %s1 = inlined_call_operand.vmem [shape: bf16[200,80], index: 1, kind: input, shape index: {}]
  %s2 = inlined_call_operand.vmem [shape: f32[200,1], index: 2, kind: input, shape index: {}]
  %s3 = inlined_call_operand.vmem [shape: f32[200,1], index: 3, kind: input, shape index: {}]
  %s4 = inlined_call_operand.hbm [shape: f32[200,196], index: 4, kind: output, shape index: {}]
  %s5 = sld [smem:[#allocation0]]
  $region26: #{tpu_custom_call.1} parent=0
    _
  %s7 = ssub.s32 1, %s5
  %s8 = scalar_select 0, %s7, %s5
  $region1: #{tpu_custom_call.1} parent=0
    #allocation2 [shape = 'u8[204800]{0}', space=vmem, size = 0x32000, scoped, tag = 'output window, operand 0, single buffered']
    #allocation3 [shape = 's32[1]{0}', space=sflag, size = 0x4, scoped, tag = 'scoped memory for tpu_custom_call.1']
    %9 = vsyncpa [#allocation3], 0
    // Predicated region
    $region2: #{tpu_custom_call.1} parent=1 // pred_check
      _
    $region3: #{tpu_custom_call.1} parent=1 // pred_check_branch
      %11 = sbr.rel (0) target = $region5
    $region4: #{tpu_custom_call.1} parent=1 // pred_region
      _
    $region5: #{tpu_custom_call.1} parent=1 // pred_fallthru
      _
    // Predicated region
    $region6: #{tpu_custom_call.1} parent=1 // pred_check
      _
    $region7: #{tpu_custom_call.1} parent=1 // pred_check_branch
      %13 = sbr.rel (0) target = $region9
    $region8: #{tpu_custom_call.1} parent=1 // pred_region
      _
    $region9: #{tpu_custom_call.1} parent=1 // pred_fallthru
      _
    // Predicated region
    $region10: #{tpu_custom_call.1} parent=1 // pred_check
      _
    $region11: #{tpu_custom_call.1} parent=1 // pred_check_branch
      %15 = sbr.rel (0) target = $region13
    $region12: #{tpu_custom_call.1} parent=1 // pred_region
      _
    $region13: #{tpu_custom_call.1} parent=1 // pred_fallthru
      _
    // Predicated region
    $region14: #{tpu_custom_call.1} parent=1 // pred_check
      _
    $region15: #{tpu_custom_call.1} parent=1 // pred_check_branch
      %17 = sbr.rel (0) target = $region17
    $region16: #{tpu_custom_call.1} parent=1 // pred_region
      _
    $region17: #{tpu_custom_call.1} parent=1 // pred_fallthru
      _
    %v19 = vld [vmem:[%s1] sm:$0xf]
    %v20 = vld [vmem:[%s1 + $0x4] sm:$0xf]
    %v21 = vld [vmem:[%s1 + $0x8] sm:$0xf]
    %v22 = vld [vmem:[%s1 + $0xc] sm:$0xf]
    %v23 = vld [vmem:[%s1 + $0x10] sm:$0xf]
    %v24 = vld [vmem:[%s1 + $0x14] sm:$0xf]
    %v25 = vld [vmem:[%s1 + $0x18] sm:$0xf]
    %v26 = vld [vmem:[%s1 + $0x1c] sm:$0xf]
    %v27 = vld [vmem:[%s1 + $0x20] sm:$0xf]
    %v28 = vld [vmem:[%s1 + $0x24] sm:$0xf]
    %v29 = vld [vmem:[%s1 + $0x28] sm:$0xf]
    %v30 = vld [vmem:[%s1 + $0x2c] sm:$0xf]
    %v31 = vld [vmem:[%s1 + $0x30] sm:$0xf]
    %v32 = vld [vmem:[%s1 + $0x34] sm:$0xf]
    %v33 = vld [vmem:[%s1 + $0x38] sm:$0xf]
    %v34 = vld [vmem:[%s1 + $0x3c] sm:$0xf]
    %v35 = vld [vmem:[%s1 + $0x40] sm:$0xf]
    %v36 = vld [vmem:[%s1 + $0x44] sm:$0xf]
    %v37 = vld [vmem:[%s1 + $0x48] sm:$0xf]
    %v38 = vld [vmem:[%s1 + $0x4c] sm:$0xf]
    %v39 = vld [vmem:[%s1 + $0x50] sm:$0xf]
    %v40 = vld [vmem:[%s1 + $0x54] sm:$0xf]
    %v41 = vld [vmem:[%s1 + $0x58] sm:$0xf]
    %v42 = vld [vmem:[%s1 + $0x5c] sm:$0xf]
    %v43 = vld [vmem:[%s1 + $0x60] sm:$0xf]
    %v44 = vld [vmem:[%s0] sm:$0xff]
    %v45 = vld [vmem:[%s0 + $0x8] sm:$0xff]
    %v46 = vld [vmem:[%s0 + $0x10] sm:$0xff]
    %v47 = vld [vmem:[%s0 + $0x18] sm:$0xff]
    %v48 = vld [vmem:[%s0 + $0x20] sm:$0xff]
    %v49 = vld [vmem:[%s0 + $0x28] sm:$0xff]
    %v50 = vld [vmem:[%s0 + $0x30] sm:$0xff]
    %v51 = vld [vmem:[%s0 + $0x38] sm:$0xff]
    %v52 = vld [vmem:[%s0 + $0x40] sm:$0xff]
    %v53 = vld [vmem:[%s0 + $0x48] sm:$0xff]
    %v79 = vunpack.c.l.b16 %v19
    %v80 = vunpack.c.l.b16 %v20
    %v81 = vunpack.c.l.b16 %v21
    %v82 = vunpack.c.l.b16 %v22
    %v83 = vunpack.c.l.b16 %v23
    %v84 = vunpack.c.l.b16 %v24
    %v85 = vunpack.c.l.b16 %v25
    %v86 = vunpack.c.l.b16 %v26
    %v87 = vunpack.c.l.b16 %v27
    %v88 = vunpack.c.l.b16 %v28
    %v89 = vunpack.c.l.b16 %v29
    %v90 = vunpack.c.l.b16 %v30
    %v91 = vunpack.c.l.b16 %v31
    %v92 = vunpack.c.l.b16 %v32
    %v93 = vunpack.c.l.b16 %v33
    %v94 = vunpack.c.l.b16 %v34
    %v95 = vunpack.c.l.b16 %v35
    %v96 = vunpack.c.l.b16 %v36
    %v97 = vunpack.c.l.b16 %v37
    %v98 = vunpack.c.l.b16 %v38
    %v99 = vunpack.c.l.b16 %v39
    %v100 = vunpack.c.l.b16 %v40
    %v101 = vunpack.c.l.b16 %v41
    %v102 = vunpack.c.l.b16 %v42
    %v103 = vunpack.c.l.b16 %v43
    %v104 = vpack.c.b16 %v80, %v79
    %v105 = vpack.c.b16 %v82, %v81
    %v106 = vpack.c.b16 %v84, %v83
    %v107 = vpack.c.b16 %v86, %v85
    %v108 = vpack.c.b16 %v88, %v87
    %v109 = vpack.c.b16 %v90, %v89
    %v110 = vpack.c.b16 %v92, %v91
    %v111 = vpack.c.b16 %v94, %v93
    %v112 = vpack.c.b16 %v96, %v95
    %v113 = vpack.c.b16 %v98, %v97
    %v114 = vpack.c.b16 %v100, %v99
    %v115 = vpack.c.b16 %v102, %v101
    %v116 = vpack.c.b16 %v103, %v103
    %v127 = vunpack.c.l.b16 %v44
    %v128 = vunpack.c.h.b16 %v44
    %v129 = vunpack.c.l.b16 %v45
    %v130 = vunpack.c.h.b16 %v45
    %v131 = vunpack.c.l.b16 %v46
    %v132 = vunpack.c.h.b16 %v46
    %v133 = vunpack.c.l.b16 %v47
    %v134 = vunpack.c.h.b16 %v47
    %v135 = vunpack.c.l.b16 %v48
    %v136 = vunpack.c.h.b16 %v48
    %v137 = vunpack.c.l.b16 %v49
    %v138 = vunpack.c.h.b16 %v49
    %v139 = vunpack.c.l.b16 %v50
    %v140 = vunpack.c.h.b16 %v50
    %v141 = vunpack.c.l.b16 %v51
    %v142 = vunpack.c.h.b16 %v51
    %v143 = vunpack.c.l.b16 %v52
    %v144 = vunpack.c.h.b16 %v52
    %v145 = vunpack.c.l.b16 %v53
    %v146 = vunpack.c.h.b16 %v53
    %v147 = vpack.c.b16 %v129, %v127
    %v148 = vpack.c.b16 %v130, %v128
    %v149 = vpack.c.b16 %v133, %v131
    %v150 = vpack.c.b16 %v134, %v132
    %v151 = vpack.c.b16 %v137, %v135
    %v152 = vpack.c.b16 %v138, %v136
    %v153 = vpack.c.b16 %v141, %v139
    %v154 = vpack.c.b16 %v142, %v140
    %v155 = vpack.c.b16 %v145, %v143
    %v156 = vpack.c.b16 %v146, %v144
    %vm167 = vcmask 654336
    %v169 = vsel %vm167, %v104, 0
    %v172 = vsel %vm167, %v105, 0
    %v175 = vsel %vm167, %v106, 0
    %v178 = vsel %vm167, %v107, 0
    %v181 = vsel %vm167, %v108, 0
    %v184 = vsel %vm167, %v109, 0
    %v187 = vsel %vm167, %v110, 0
    %v190 = vsel %vm167, %v111, 0
    %v193 = vsel %vm167, %v112, 0
    %v196 = vsel %vm167, %v113, 0
    %v199 = vsel %vm167, %v114, 0
    %v202 = vsel %vm167, %v115, 0
    %v205 = vsel %vm167, %v116, 0
    %207 = vmatpush.bf16.msra.mxu0 0
    %208 = vmatpush.bf16.msra.mxu0 0
    %209 = vmatpush.bf16.msra.mxu0 0
    %210 = vmatpush.bf16.msra.mxu0 %v155
    %211 = vmatpush.bf16.msra.mxu0 %v153
    %212 = vmatpush.bf16.msra.mxu0 %v151
    %213 = vmatpush.bf16.msra.mxu0 %v149
    %214 = vmatpush.bf16.msra.mxu0 %v147
    %215 = vmatmul.bf16.gmra.mxu0 %v169
    %v216 = vpop.f32.mrf.mxu0
    %v217 = vadd.f32 0.0, %v216
    %v218 = vpop.f32.mrf.mxu0
    %v219 = vadd.f32 0.0, %v218
    %220 = vmatmul.bf16.gmra.mxu0 %v172
    %v221 = vpop.f32.mrf.mxu0
    %v222 = vadd.f32 0.0, %v221
    %v223 = vpop.f32.mrf.mxu0
    %v224 = vadd.f32 0.0, %v223
    %225 = vmatmul.bf16.gmra.mxu0 %v175
    %v226 = vpop.f32.mrf.mxu0
    %v227 = vadd.f32 0.0, %v226
    %v228 = vpop.f32.mrf.mxu0
    %v229 = vadd.f32 0.0, %v228
    %230 = vmatmul.bf16.gmra.mxu0 %v178
    %v231 = vpop.f32.mrf.mxu0
    %v232 = vadd.f32 0.0, %v231
    %v233 = vpop.f32.mrf.mxu0
    %v234 = vadd.f32 0.0, %v233
    %235 = vmatmul.bf16.gmra.mxu0 %v181
    %v236 = vpop.f32.mrf.mxu0
    %v237 = vadd.f32 0.0, %v236
    %v238 = vpop.f32.mrf.mxu0
    %v239 = vadd.f32 0.0, %v238
    %240 = vmatmul.bf16.gmra.mxu0 %v184
    %v241 = vpop.f32.mrf.mxu0
    %v242 = vadd.f32 0.0, %v241
    %v243 = vpop.f32.mrf.mxu0
    %v244 = vadd.f32 0.0, %v243
    %245 = vmatmul.bf16.gmra.mxu0 %v187
    %v246 = vpop.f32.mrf.mxu0
    %v247 = vadd.f32 0.0, %v246
    %v248 = vpop.f32.mrf.mxu0
    %v249 = vadd.f32 0.0, %v248
    %250 = vmatmul.bf16.gmra.mxu0 %v190
    %v251 = vpop.f32.mrf.mxu0
    %v252 = vadd.f32 0.0, %v251
    %v253 = vpop.f32.mrf.mxu0
    %v254 = vadd.f32 0.0, %v253
    %255 = vmatmul.bf16.gmra.mxu0 %v193
    %v256 = vpop.f32.mrf.mxu0
    %v257 = vadd.f32 0.0, %v256
    %v258 = vpop.f32.mrf.mxu0
    %v259 = vadd.f32 0.0, %v258
    %260 = vmatmul.bf16.gmra.mxu0 %v196
    %v261 = vpop.f32.mrf.mxu0
    %v262 = vadd.f32 0.0, %v261
    %v263 = vpop.f32.mrf.mxu0
    %v264 = vadd.f32 0.0, %v263
    %265 = vmatmul.bf16.gmra.mxu0 %v199
    %v266 = vpop.f32.mrf.mxu0
    %v267 = vadd.f32 0.0, %v266
    %v268 = vpop.f32.mrf.mxu0
    %v269 = vadd.f32 0.0, %v268
    %270 = vmatmul.bf16.gmra.mxu0 %v202
    %v271 = vpop.f32.mrf.mxu0
    %v272 = vadd.f32 0.0, %v271
    %v273 = vpop.f32.mrf.mxu0
    %v274 = vadd.f32 0.0, %v273
    %275 = vmatmul.bf16.gmra.mxu0 %v205
    %v276 = vpop.f32.mrf.mxu0
    %v277 = vadd.f32 0.0, %v276
    %v278 = vpop.f32.mrf.mxu0
    %279 = vdwg.mxu0
    %280 = vmatpush.bf16.msra.mxu0 0
    %281 = vmatpush.bf16.msra.mxu0 0
    %282 = vmatpush.bf16.msra.mxu0 0
    %283 = vmatpush.bf16.msra.mxu0 %v156
    %284 = vmatpush.bf16.msra.mxu0 %v154
    %285 = vmatpush.bf16.msra.mxu0 %v152
    %286 = vmatpush.bf16.msra.mxu0 %v150
    %287 = vmatpush.bf16.msra.mxu0 %v148
    %288 = vmatmul.bf16.gmra.mxu0 %v169
    %v289 = vpop.f32.mrf.mxu0
    %v290 = vadd.f32 0.0, %v289
    %v291 = vpop.f32.mrf.mxu0
    %v292 = vadd.f32 0.0, %v291
    %293 = vmatmul.bf16.gmra.mxu0 %v172
    %v294 = vpop.f32.mrf.mxu0
    %v295 = vadd.f32 0.0, %v294
    %v296 = vpop.f32.mrf.mxu0
    %v297 = vadd.f32 0.0, %v296
    %298 = vmatmul.bf16.gmra.mxu0 %v175
    %v299 = vpop.f32.mrf.mxu0
    %v300 = vadd.f32 0.0, %v299
    %v301 = vpop.f32.mrf.mxu0
    %v302 = vadd.f32 0.0, %v301
    %303 = vmatmul.bf16.gmra.mxu0 %v178
    %v304 = vpop.f32.mrf.mxu0
    %v305 = vadd.f32 0.0, %v304
    %v306 = vpop.f32.mrf.mxu0
    %v307 = vadd.f32 0.0, %v306
    %308 = vmatmul.bf16.gmra.mxu0 %v181
    %v309 = vpop.f32.mrf.mxu0
    %v310 = vadd.f32 0.0, %v309
    %v311 = vpop.f32.mrf.mxu0
    %v312 = vadd.f32 0.0, %v311
    %313 = vmatmul.bf16.gmra.mxu0 %v184
    %v314 = vpop.f32.mrf.mxu0
    %v315 = vadd.f32 0.0, %v314
    %v316 = vpop.f32.mrf.mxu0
    %v317 = vadd.f32 0.0, %v316
    %318 = vmatmul.bf16.gmra.mxu0 %v187
    %v319 = vpop.f32.mrf.mxu0
    %v320 = vadd.f32 0.0, %v319
    %v321 = vpop.f32.mrf.mxu0
    %v322 = vadd.f32 0.0, %v321
    %323 = vmatmul.bf16.gmra.mxu0 %v190
    %v324 = vpop.f32.mrf.mxu0
    %v325 = vadd.f32 0.0, %v324
    %v326 = vpop.f32.mrf.mxu0
    %v327 = vadd.f32 0.0, %v326
    %328 = vmatmul.bf16.gmra.mxu0 %v193
    %v329 = vpop.f32.mrf.mxu0
    %v330 = vadd.f32 0.0, %v329
    %v331 = vpop.f32.mrf.mxu0
    %v332 = vadd.f32 0.0, %v331
    %333 = vmatmul.bf16.gmra.mxu0 %v196
    %v334 = vpop.f32.mrf.mxu0
    %v335 = vadd.f32 0.0, %v334
    %v336 = vpop.f32.mrf.mxu0
    %v337 = vadd.f32 0.0, %v336
    %338 = vmatmul.bf16.gmra.mxu0 %v199
    %v339 = vpop.f32.mrf.mxu0
    %v340 = vadd.f32 0.0, %v339
    %v341 = vpop.f32.mrf.mxu0
    %v342 = vadd.f32 0.0, %v341
    %343 = vmatmul.bf16.gmra.mxu0 %v202
    %v344 = vpop.f32.mrf.mxu0
    %v345 = vadd.f32 0.0, %v344
    %v346 = vpop.f32.mrf.mxu0
    %v347 = vadd.f32 0.0, %v346
    %348 = vmatmul.bf16.gmra.mxu0 %v205
    %v349 = vpop.f32.mrf.mxu0
    %v350 = vadd.f32 0.0, %v349
    %v351 = vpop.f32.mrf.mxu0
    %352 = vdwg.mxu0
    %vm353 = vcmask 556032
    %v354 = vsel %vm353, %v290, 0.0
    %v355 = vadd.f32 %v217, %v354
    %356 = vadd.xlane.f32.xlu0 %v355
    %v357 = vpop.xlane.xlu0 %356
    %v358 = vsel %vm353, %v292, 0.0
    %v359 = vadd.f32 %v219, %v358
    %360 = vadd.xlane.f32.xlu0 %v359
    %v361 = vpop.xlane.xlu0 %360
    %v362 = vsel %vm353, %v295, 0.0
    %v363 = vadd.f32 %v222, %v362
    %364 = vadd.xlane.f32.xlu0 %v363
    %v365 = vpop.xlane.xlu0 %364
    %v366 = vsel %vm353, %v297, 0.0
    %v367 = vadd.f32 %v224, %v366
    %368 = vadd.xlane.f32.xlu0 %v367
    %v369 = vpop.xlane.xlu0 %368
    %v370 = vsel %vm353, %v300, 0.0
    %v371 = vadd.f32 %v227, %v370
    %372 = vadd.xlane.f32.xlu0 %v371
    %v373 = vpop.xlane.xlu0 %372
    %v374 = vsel %vm353, %v302, 0.0
    %v375 = vadd.f32 %v229, %v374
    %376 = vadd.xlane.f32.xlu0 %v375
    %v377 = vpop.xlane.xlu0 %376
    %v378 = vsel %vm353, %v305, 0.0
    %v379 = vadd.f32 %v232, %v378
    %380 = vadd.xlane.f32.xlu0 %v379
    %v381 = vpop.xlane.xlu0 %380
    %v382 = vsel %vm353, %v307, 0.0
    %v383 = vadd.f32 %v234, %v382
    %384 = vadd.xlane.f32.xlu0 %v383
    %v385 = vpop.xlane.xlu0 %384
    %v386 = vsel %vm353, %v310, 0.0
    %v387 = vadd.f32 %v237, %v386
    %388 = vadd.xlane.f32.xlu0 %v387
    %v389 = vpop.xlane.xlu0 %388
    %v390 = vsel %vm353, %v312, 0.0
    %v391 = vadd.f32 %v239, %v390
    %392 = vadd.xlane.f32.xlu0 %v391
    %v393 = vpop.xlane.xlu0 %392
    %v394 = vsel %vm353, %v315, 0.0
    %v395 = vadd.f32 %v242, %v394
    %396 = vadd.xlane.f32.xlu0 %v395
    %v397 = vpop.xlane.xlu0 %396
    %v398 = vsel %vm353, %v317, 0.0
    %v399 = vadd.f32 %v244, %v398
    %400 = vadd.xlane.f32.xlu0 %v399
    %v401 = vpop.xlane.xlu0 %400
    %v402 = vsel %vm353, %v320, 0.0
    %v403 = vadd.f32 %v247, %v402
    %404 = vadd.xlane.f32.xlu0 %v403
    %v405 = vpop.xlane.xlu0 %404
    %v406 = vsel %vm353, %v322, 0.0
    %v407 = vadd.f32 %v249, %v406
    %408 = vadd.xlane.f32.xlu0 %v407
    %v409 = vpop.xlane.xlu0 %408
    %v410 = vsel %vm353, %v325, 0.0
    %v411 = vadd.f32 %v252, %v410
    %412 = vadd.xlane.f32.xlu0 %v411
    %v413 = vpop.xlane.xlu0 %412
    %v414 = vsel %vm353, %v327, 0.0
    %v415 = vadd.f32 %v254, %v414
    %416 = vadd.xlane.f32.xlu0 %v415
    %v417 = vpop.xlane.xlu0 %416
    %v418 = vsel %vm353, %v330, 0.0
    %v419 = vadd.f32 %v257, %v418
    %420 = vadd.xlane.f32.xlu0 %v419
    %v421 = vpop.xlane.xlu0 %420
    %v422 = vsel %vm353, %v332, 0.0
    %v423 = vadd.f32 %v259, %v422
    %424 = vadd.xlane.f32.xlu0 %v423
    %v425 = vpop.xlane.xlu0 %424
    %v426 = vsel %vm353, %v335, 0.0
    %v427 = vadd.f32 %v262, %v426
    %428 = vadd.xlane.f32.xlu0 %v427
    %v429 = vpop.xlane.xlu0 %428
    %v430 = vsel %vm353, %v337, 0.0
    %v431 = vadd.f32 %v264, %v430
    %432 = vadd.xlane.f32.xlu0 %v431
    %v433 = vpop.xlane.xlu0 %432
    %v434 = vsel %vm353, %v340, 0.0
    %v435 = vadd.f32 %v267, %v434
    %436 = vadd.xlane.f32.xlu0 %v435
    %v437 = vpop.xlane.xlu0 %436
    %v438 = vsel %vm353, %v342, 0.0
    %v439 = vadd.f32 %v269, %v438
    %440 = vadd.xlane.f32.xlu0 %v439
    %v441 = vpop.xlane.xlu0 %440
    %v442 = vsel %vm353, %v345, 0.0
    %v443 = vadd.f32 %v272, %v442
    %444 = vadd.xlane.f32.xlu0 %v443
    %v445 = vpop.xlane.xlu0 %444
    %v446 = vsel %vm353, %v347, 0.0
    %v447 = vadd.f32 %v274, %v446
    %448 = vadd.xlane.f32.xlu0 %v447
    %v449 = vpop.xlane.xlu0 %448
    %v450 = vsel %vm353, %v350, 0.0
    %v451 = vadd.f32 %v277, %v450
    %452 = vadd.xlane.f32.xlu0 %v451
    %v453 = vpop.xlane.xlu0 %452
    %v454 = vmul.f32 %v357, 0.0051020407
    %v455 = vmul.f32 %v361, 0.0051020407
    %v456 = vmul.f32 %v365, 0.0051020407
    %v457 = vmul.f32 %v369, 0.0051020407
    %v458 = vmul.f32 %v373, 0.0051020407
    %v459 = vmul.f32 %v377, 0.0051020407
    %v460 = vmul.f32 %v381, 0.0051020407
    %v461 = vmul.f32 %v385, 0.0051020407
    %v462 = vmul.f32 %v389, 0.0051020407
    %v463 = vmul.f32 %v393, 0.0051020407
    %v464 = vmul.f32 %v397, 0.0051020407
    %v465 = vmul.f32 %v401, 0.0051020407
    %v466 = vmul.f32 %v405, 0.0051020407
    %v467 = vmul.f32 %v409, 0.0051020407
    %v468 = vmul.f32 %v413, 0.0051020407
    %v469 = vmul.f32 %v417, 0.0051020407
    %v470 = vmul.f32 %v421, 0.0051020407
    %v471 = vmul.f32 %v425, 0.0051020407
    %v472 = vmul.f32 %v429, 0.0051020407
    %v473 = vmul.f32 %v433, 0.0051020407
    %v474 = vmul.f32 %v437, 0.0051020407
    %v475 = vmul.f32 %v441, 0.0051020407
    %v476 = vmul.f32 %v445, 0.0051020407
    %v477 = vmul.f32 %v449, 0.0051020407
    %v478 = vmul.f32 %v453, 0.0051020407
    %v479 = vmul.f32 %v217, %v217
    %v480 = vmul.f32 %v290, %v290
    %v481 = vmul.f32 %v219, %v219
    %v482 = vmul.f32 %v292, %v292
    %v483 = vmul.f32 %v222, %v222
    %v484 = vmul.f32 %v295, %v295
    %v485 = vmul.f32 %v224, %v224
    %v486 = vmul.f32 %v297, %v297
    %v487 = vmul.f32 %v227, %v227
    %v488 = vmul.f32 %v300, %v300
    %v489 = vmul.f32 %v229, %v229
    %v490 = vmul.f32 %v302, %v302
    %v491 = vmul.f32 %v232, %v232
    %v492 = vmul.f32 %v305, %v305
    %v493 = vmul.f32 %v234, %v234
    %v494 = vmul.f32 %v307, %v307
    %v495 = vmul.f32 %v237, %v237
    %v496 = vmul.f32 %v310, %v310
    %v497 = vmul.f32 %v239, %v239
    %v498 = vmul.f32 %v312, %v312
    %v499 = vmul.f32 %v242, %v242
    %v500 = vmul.f32 %v315, %v315
    %v501 = vmul.f32 %v244, %v244
    %v502 = vmul.f32 %v317, %v317
    %v503 = vmul.f32 %v247, %v247
    %v504 = vmul.f32 %v320, %v320
    %v505 = vmul.f32 %v249, %v249
    %v506 = vmul.f32 %v322, %v322
    %v507 = vmul.f32 %v252, %v252
    %v508 = vmul.f32 %v325, %v325
    %v509 = vmul.f32 %v254, %v254
    %v510 = vmul.f32 %v327, %v327
    %v511 = vmul.f32 %v257, %v257
    %v512 = vmul.f32 %v330, %v330
    %v513 = vmul.f32 %v259, %v259
    %v514 = vmul.f32 %v332, %v332
    %v515 = vmul.f32 %v262, %v262
    %v516 = vmul.f32 %v335, %v335
    %v517 = vmul.f32 %v264, %v264
    %v518 = vmul.f32 %v337, %v337
    %v519 = vmul.f32 %v267, %v267
    %v520 = vmul.f32 %v340, %v340
    %v521 = vmul.f32 %v269, %v269
    %v522 = vmul.f32 %v342, %v342
    %v523 = vmul.f32 %v272, %v272
    %v524 = vmul.f32 %v345, %v345
    %v525 = vmul.f32 %v274, %v274
    %v526 = vmul.f32 %v347, %v347
    %v527 = vmul.f32 %v277, %v277
    %v528 = vmul.f32 %v350, %v350
    %v529 = vsel %vm353, %v480, 0.0
    %v530 = vadd.f32 %v479, %v529
    %531 = vadd.xlane.f32.xlu0 %v530
    %v532 = vpop.xlane.xlu0 %531
    %v533 = vsel %vm353, %v482, 0.0
    %v534 = vadd.f32 %v481, %v533
    %535 = vadd.xlane.f32.xlu0 %v534
    %v536 = vpop.xlane.xlu0 %535
    %v537 = vsel %vm353, %v484, 0.0
    %v538 = vadd.f32 %v483, %v537
    %539 = vadd.xlane.f32.xlu0 %v538
    %v540 = vpop.xlane.xlu0 %539
    %v541 = vsel %vm353, %v486, 0.0
    %v542 = vadd.f32 %v485, %v541
    %543 = vadd.xlane.f32.xlu0 %v542
    %v544 = vpop.xlane.xlu0 %543
    %v545 = vsel %vm353, %v488, 0.0
    %v546 = vadd.f32 %v487, %v545
    %547 = vadd.xlane.f32.xlu0 %v546
    %v548 = vpop.xlane.xlu0 %547
    %v549 = vsel %vm353, %v490, 0.0
    %v550 = vadd.f32 %v489, %v549
    %551 = vadd.xlane.f32.xlu0 %v550
    %v552 = vpop.xlane.xlu0 %551
    %v553 = vsel %vm353, %v492, 0.0
    %v554 = vadd.f32 %v491, %v553
    %555 = vadd.xlane.f32.xlu0 %v554
    %v556 = vpop.xlane.xlu0 %555
    %v557 = vsel %vm353, %v494, 0.0
    %v558 = vadd.f32 %v493, %v557
    %559 = vadd.xlane.f32.xlu0 %v558
    %v560 = vpop.xlane.xlu0 %559
    %v561 = vsel %vm353, %v496, 0.0
    %v562 = vadd.f32 %v495, %v561
    %563 = vadd.xlane.f32.xlu0 %v562
    %v564 = vpop.xlane.xlu0 %563
    %v565 = vsel %vm353, %v498, 0.0
    %v566 = vadd.f32 %v497, %v565
    %567 = vadd.xlane.f32.xlu0 %v566
    %v568 = vpop.xlane.xlu0 %567
    %v569 = vsel %vm353, %v500, 0.0
    %v570 = vadd.f32 %v499, %v569
    %571 = vadd.xlane.f32.xlu0 %v570
    %v572 = vpop.xlane.xlu0 %571
    %v573 = vsel %vm353, %v502, 0.0
    %v574 = vadd.f32 %v501, %v573
    %575 = vadd.xlane.f32.xlu0 %v574
    %v576 = vpop.xlane.xlu0 %575
    %v577 = vsel %vm353, %v504, 0.0
    %v578 = vadd.f32 %v503, %v577
    %579 = vadd.xlane.f32.xlu0 %v578
    %v580 = vpop.xlane.xlu0 %579
    %v581 = vsel %vm353, %v506, 0.0
    %v582 = vadd.f32 %v505, %v581
    %583 = vadd.xlane.f32.xlu0 %v582
    %v584 = vpop.xlane.xlu0 %583
    %v585 = vsel %vm353, %v508, 0.0
    %v586 = vadd.f32 %v507, %v585
    %587 = vadd.xlane.f32.xlu0 %v586
    %v588 = vpop.xlane.xlu0 %587
    %v589 = vsel %vm353, %v510, 0.0
    %v590 = vadd.f32 %v509, %v589
    %591 = vadd.xlane.f32.xlu0 %v590
    %v592 = vpop.xlane.xlu0 %591
    %v593 = vsel %vm353, %v512, 0.0
    %v594 = vadd.f32 %v511, %v593
    %595 = vadd.xlane.f32.xlu0 %v594
    %v596 = vpop.xlane.xlu0 %595
    %v597 = vsel %vm353, %v514, 0.0
    %v598 = vadd.f32 %v513, %v597
    %599 = vadd.xlane.f32.xlu0 %v598
    %v600 = vpop.xlane.xlu0 %599
    %v601 = vsel %vm353, %v516, 0.0
    %v602 = vadd.f32 %v515, %v601
    %603 = vadd.xlane.f32.xlu0 %v602
    %v604 = vpop.xlane.xlu0 %603
    %v605 = vsel %vm353, %v518, 0.0
    %v606 = vadd.f32 %v517, %v605
    %607 = vadd.xlane.f32.xlu0 %v606
    %v608 = vpop.xlane.xlu0 %607
    %v609 = vsel %vm353, %v520, 0.0
    %v610 = vadd.f32 %v519, %v609
    %611 = vadd.xlane.f32.xlu0 %v610
    %v612 = vpop.xlane.xlu0 %611
    %v613 = vsel %vm353, %v522, 0.0
    %v614 = vadd.f32 %v521, %v613
    %615 = vadd.xlane.f32.xlu0 %v614
    %v616 = vpop.xlane.xlu0 %615
    %v617 = vsel %vm353, %v524, 0.0
    %v618 = vadd.f32 %v523, %v617
    %619 = vadd.xlane.f32.xlu0 %v618
    %v620 = vpop.xlane.xlu0 %619
    %v621 = vsel %vm353, %v526, 0.0
    %v622 = vadd.f32 %v525, %v621
    %623 = vadd.xlane.f32.xlu0 %v622
    %v624 = vpop.xlane.xlu0 %623
    %v625 = vsel %vm353, %v528, 0.0
    %v626 = vadd.f32 %v527, %v625
    %627 = vadd.xlane.f32.xlu0 %v626
    %v628 = vpop.xlane.xlu0 %627
    %v629 = vmul.f32 %v532, 0.0051020407
    %v630 = vmul.f32 %v536, 0.0051020407
    %v631 = vmul.f32 %v540, 0.0051020407
    %v632 = vmul.f32 %v544, 0.0051020407
    %v633 = vmul.f32 %v548, 0.0051020407
    %v634 = vmul.f32 %v552, 0.0051020407
    %v635 = vmul.f32 %v556, 0.0051020407
    %v636 = vmul.f32 %v560, 0.0051020407
    %v637 = vmul.f32 %v564, 0.0051020407
    %v638 = vmul.f32 %v568, 0.0051020407
    %v639 = vmul.f32 %v572, 0.0051020407
    %v640 = vmul.f32 %v576, 0.0051020407
    %v641 = vmul.f32 %v580, 0.0051020407
    %v642 = vmul.f32 %v584, 0.0051020407
    %v643 = vmul.f32 %v588, 0.0051020407
    %v644 = vmul.f32 %v592, 0.0051020407
    %v645 = vmul.f32 %v596, 0.0051020407
    %v646 = vmul.f32 %v600, 0.0051020407
    %v647 = vmul.f32 %v604, 0.0051020407
    %v648 = vmul.f32 %v608, 0.0051020407
    %v649 = vmul.f32 %v612, 0.0051020407
    %v650 = vmul.f32 %v616, 0.0051020407
    %v651 = vmul.f32 %v620, 0.0051020407
    %v652 = vmul.f32 %v624, 0.0051020407
    %v653 = vmul.f32 %v628, 0.0051020407
    %v654 = vmul.f32 %v454, %v454
    %v655 = vmul.f32 %v455, %v455
    %v656 = vmul.f32 %v456, %v456
    %v657 = vmul.f32 %v457, %v457
    %v658 = vmul.f32 %v458, %v458
    %v659 = vmul.f32 %v459, %v459
    %v660 = vmul.f32 %v460, %v460
    %v661 = vmul.f32 %v461, %v461
    %v662 = vmul.f32 %v462, %v462
    %v663 = vmul.f32 %v463, %v463
    %v664 = vmul.f32 %v464, %v464
    %v665 = vmul.f32 %v465, %v465
    %v666 = vmul.f32 %v466, %v466
    %v667 = vmul.f32 %v467, %v467
    %v668 = vmul.f32 %v468, %v468
    %v669 = vmul.f32 %v469, %v469
    %v670 = vmul.f32 %v470, %v470
    %v671 = vmul.f32 %v471, %v471
    %v672 = vmul.f32 %v472, %v472
    %v673 = vmul.f32 %v473, %v473
    %v674 = vmul.f32 %v474, %v474
    %v675 = vmul.f32 %v475, %v475
    %v676 = vmul.f32 %v476, %v476
    %v677 = vmul.f32 %v477, %v477
    %v678 = vmul.f32 %v478, %v478
    %v679 = vsub.f32 %v629, %v654
    %v680 = vsub.f32 %v630, %v655
    %v681 = vsub.f32 %v631, %v656
    %v682 = vsub.f32 %v632, %v657
    %v683 = vsub.f32 %v633, %v658
    %v684 = vsub.f32 %v634, %v659
    %v685 = vsub.f32 %v635, %v660
    %v686 = vsub.f32 %v636, %v661
    %v687 = vsub.f32 %v637, %v662
    %v688 = vsub.f32 %v638, %v663
    %v689 = vsub.f32 %v639, %v664
    %v690 = vsub.f32 %v640, %v665
    %v691 = vsub.f32 %v641, %v666
    %v692 = vsub.f32 %v642, %v667
    %v693 = vsub.f32 %v643, %v668
    %v694 = vsub.f32 %v644, %v669
    %v695 = vsub.f32 %v645, %v670
    %v696 = vsub.f32 %v646, %v671
    %v697 = vsub.f32 %v647, %v672
    %v698 = vsub.f32 %v648, %v673
    %v699 = vsub.f32 %v649, %v674
    %v700 = vsub.f32 %v650, %v675
    %v701 = vsub.f32 %v651, %v676
    %v702 = vsub.f32 %v652, %v677
    %v703 = vsub.f32 %v653, %v678
    %v704 = vmax.f32 %v679, 0.0
    %v705 = vmax.f32 %v680, 0.0
    %v706 = vmax.f32 %v681, 0.0
    %v707 = vmax.f32 %v682, 0.0
    %v708 = vmax.f32 %v683, 0.0
    %v709 = vmax.f32 %v684, 0.0
    %v710 = vmax.f32 %v685, 0.0
    %v711 = vmax.f32 %v686, 0.0
    %v712 = vmax.f32 %v687, 0.0
    %v713 = vmax.f32 %v688, 0.0
    %v714 = vmax.f32 %v689, 0.0
    %v715 = vmax.f32 %v690, 0.0
    %v716 = vmax.f32 %v691, 0.0
    %v717 = vmax.f32 %v692, 0.0
    %v718 = vmax.f32 %v693, 0.0
    %v719 = vmax.f32 %v694, 0.0
    %v720 = vmax.f32 %v695, 0.0
    %v721 = vmax.f32 %v696, 0.0
    %v722 = vmax.f32 %v697, 0.0
    %v723 = vmax.f32 %v698, 0.0
    %v724 = vmax.f32 %v699, 0.0
    %v725 = vmax.f32 %v700, 0.0
    %v726 = vmax.f32 %v701, 0.0
    %v727 = vmax.f32 %v702, 0.0
    %v728 = vmax.f32 %v703, 0.0
    %v729 = vadd.f32 %v704, 0.001
    %v730 = vadd.f32 %v705, 0.001
    %v731 = vadd.f32 %v706, 0.001
    %v732 = vadd.f32 %v707, 0.001
    %v733 = vadd.f32 %v708, 0.001
    %v734 = vadd.f32 %v709, 0.001
    %v735 = vadd.f32 %v710, 0.001
    %v736 = vadd.f32 %v711, 0.001
    %v737 = vadd.f32 %v712, 0.001
    %v738 = vadd.f32 %v713, 0.001
    %v739 = vadd.f32 %v714, 0.001
    %v740 = vadd.f32 %v715, 0.001
    %v741 = vadd.f32 %v716, 0.001
    %v742 = vadd.f32 %v717, 0.001
    %v743 = vadd.f32 %v718, 0.001
    %v744 = vadd.f32 %v719, 0.001
    %v745 = vadd.f32 %v720, 0.001
    %v746 = vadd.f32 %v721, 0.001
    %v747 = vadd.f32 %v722, 0.001
    %v748 = vadd.f32 %v723, 0.001
    %v749 = vadd.f32 %v724, 0.001
    %v750 = vadd.f32 %v725, 0.001
    %v751 = vadd.f32 %v726, 0.001
    %v752 = vadd.f32 %v727, 0.001
    %v753 = vadd.f32 %v728, 0.001
    %v754 = vrsqrt.pop %v729
    %v755 = vmul.f32 %v754, %v729
    %v756 = vmul.f32 %v755, %v754
    %v757 = vmul.f32 0.5, %v756
    %v758 = vsub.f32 1.5, %v757
    %v759 = vmul.f32 %v754, %v758
    %vm760 = vweird.f32 %v729
    %vm761 = vweird.f32 %v754
    %vm762 = vmor %vm760, %vm761
    %v763 = vsel %vm762, %v754, %v759
    %v764 = vrsqrt.pop %v730
    %v765 = vmul.f32 %v764, %v730
    %v766 = vmul.f32 %v765, %v764
    %v767 = vmul.f32 0.5, %v766
    %v768 = vsub.f32 1.5, %v767
    %v769 = vmul.f32 %v764, %v768
    %vm770 = vweird.f32 %v730
    %vm771 = vweird.f32 %v764
    %vm772 = vmor %vm770, %vm771
    %v773 = vsel %vm772, %v764, %v769
    %v774 = vrsqrt.pop %v731
    %v775 = vmul.f32 %v774, %v731
    %v776 = vmul.f32 %v775, %v774
    %v777 = vmul.f32 0.5, %v776
    %v778 = vsub.f32 1.5, %v777
    %v779 = vmul.f32 %v774, %v778
    %vm780 = vweird.f32 %v731
    %vm781 = vweird.f32 %v774
    %vm782 = vmor %vm780, %vm781
    %v783 = vsel %vm782, %v774, %v779
    %v784 = vrsqrt.pop %v732
    %v785 = vmul.f32 %v784, %v732
    %v786 = vmul.f32 %v785, %v784
    %v787 = vmul.f32 0.5, %v786
    %v788 = vsub.f32 1.5, %v787
    %v789 = vmul.f32 %v784, %v788
    %vm790 = vweird.f32 %v732
    %vm791 = vweird.f32 %v784
    %vm792 = vmor %vm790, %vm791
    %v793 = vsel %vm792, %v784, %v789
    %v794 = vrsqrt.pop %v733
    %v795 = vmul.f32 %v794, %v733
    %v796 = vmul.f32 %v795, %v794
    %v797 = vmul.f32 0.5, %v796
    %v798 = vsub.f32 1.5, %v797
    %v799 = vmul.f32 %v794, %v798
    %vm800 = vweird.f32 %v733
    %vm801 = vweird.f32 %v794
    %vm802 = vmor %vm800, %vm801
    %v803 = vsel %vm802, %v794, %v799
    %v804 = vrsqrt.pop %v734
    %v805 = vmul.f32 %v804, %v734
    %v806 = vmul.f32 %v805, %v804
    %v807 = vmul.f32 0.5, %v806
    %v808 = vsub.f32 1.5, %v807
    %v809 = vmul.f32 %v804, %v808
    %vm810 = vweird.f32 %v734
    %vm811 = vweird.f32 %v804
    %vm812 = vmor %vm810, %vm811
    %v813 = vsel %vm812, %v804, %v809
    %v814 = vrsqrt.pop %v735
    %v815 = vmul.f32 %v814, %v735
    %v816 = vmul.f32 %v815, %v814
    %v817 = vmul.f32 0.5, %v816
    %v818 = vsub.f32 1.5, %v817
    %v819 = vmul.f32 %v814, %v818
    %vm820 = vweird.f32 %v735
    %vm821 = vweird.f32 %v814
    %vm822 = vmor %vm820, %vm821
    %v823 = vsel %vm822, %v814, %v819
    %v824 = vrsqrt.pop %v736
    %v825 = vmul.f32 %v824, %v736
    %v826 = vmul.f32 %v825, %v824
    %v827 = vmul.f32 0.5, %v826
    %v828 = vsub.f32 1.5, %v827
    %v829 = vmul.f32 %v824, %v828
    %vm830 = vweird.f32 %v736
    %vm831 = vweird.f32 %v824
    %vm832 = vmor %vm830, %vm831
    %v833 = vsel %vm832, %v824, %v829
    %v834 = vrsqrt.pop %v737
    %v835 = vmul.f32 %v834, %v737
    %v836 = vmul.f32 %v835, %v834
    %v837 = vmul.f32 0.5, %v836
    %v838 = vsub.f32 1.5, %v837
    %v839 = vmul.f32 %v834, %v838
    %vm840 = vweird.f32 %v737
    %vm841 = vweird.f32 %v834
    %vm842 = vmor %vm840, %vm841
    %v843 = vsel %vm842, %v834, %v839
    %v844 = vrsqrt.pop %v738
    %v845 = vmul.f32 %v844, %v738
    %v846 = vmul.f32 %v845, %v844
    %v847 = vmul.f32 0.5, %v846
    %v848 = vsub.f32 1.5, %v847
    %v849 = vmul.f32 %v844, %v848
    %vm850 = vweird.f32 %v738
    %vm851 = vweird.f32 %v844
    %vm852 = vmor %vm850, %vm851
    %v853 = vsel %vm852, %v844, %v849
    %v854 = vrsqrt.pop %v739
    %v855 = vmul.f32 %v854, %v739
    %v856 = vmul.f32 %v855, %v854
    %v857 = vmul.f32 0.5, %v856
    %v858 = vsub.f32 1.5, %v857
    %v859 = vmul.f32 %v854, %v858
    %vm860 = vweird.f32 %v739
    %vm861 = vweird.f32 %v854
    %vm862 = vmor %vm860, %vm861
    %v863 = vsel %vm862, %v854, %v859
    %v864 = vrsqrt.pop %v740
    %v865 = vmul.f32 %v864, %v740
    %v866 = vmul.f32 %v865, %v864
    %v867 = vmul.f32 0.5, %v866
    %v868 = vsub.f32 1.5, %v867
    %v869 = vmul.f32 %v864, %v868
    %vm870 = vweird.f32 %v740
    %vm871 = vweird.f32 %v864
    %vm872 = vmor %vm870, %vm871
    %v873 = vsel %vm872, %v864, %v869
    %v874 = vrsqrt.pop %v741
    %v875 = vmul.f32 %v874, %v741
    %v876 = vmul.f32 %v875, %v874
    %v877 = vmul.f32 0.5, %v876
    %v878 = vsub.f32 1.5, %v877
    %v879 = vmul.f32 %v874, %v878
    %vm880 = vweird.f32 %v741
    %vm881 = vweird.f32 %v874
    %vm882 = vmor %vm880, %vm881
    %v883 = vsel %vm882, %v874, %v879
    %v884 = vrsqrt.pop %v742
    %v885 = vmul.f32 %v884, %v742
    %v886 = vmul.f32 %v885, %v884
    %v887 = vmul.f32 0.5, %v886
    %v888 = vsub.f32 1.5, %v887
    %v889 = vmul.f32 %v884, %v888
    %vm890 = vweird.f32 %v742
    %vm891 = vweird.f32 %v884
    %vm892 = vmor %vm890, %vm891
    %v893 = vsel %vm892, %v884, %v889
    %v894 = vrsqrt.pop %v743
    %v895 = vmul.f32 %v894, %v743
    %v896 = vmul.f32 %v895, %v894
    %v897 = vmul.f32 0.5, %v896
    %v898 = vsub.f32 1.5, %v897
    %v899 = vmul.f32 %v894, %v898
    %vm900 = vweird.f32 %v743
    %vm901 = vweird.f32 %v894
    %vm902 = vmor %vm900, %vm901
    %v903 = vsel %vm902, %v894, %v899
    %v904 = vrsqrt.pop %v744
    %v905 = vmul.f32 %v904, %v744
    %v906 = vmul.f32 %v905, %v904
    %v907 = vmul.f32 0.5, %v906
    %v908 = vsub.f32 1.5, %v907
    %v909 = vmul.f32 %v904, %v908
    %vm910 = vweird.f32 %v744
    %vm911 = vweird.f32 %v904
    %vm912 = vmor %vm910, %vm911
    %v913 = vsel %vm912, %v904, %v909
    %v914 = vrsqrt.pop %v745
    %v915 = vmul.f32 %v914, %v745
    %v916 = vmul.f32 %v915, %v914
    %v917 = vmul.f32 0.5, %v916
    %v918 = vsub.f32 1.5, %v917
    %v919 = vmul.f32 %v914, %v918
    %vm920 = vweird.f32 %v745
    %vm921 = vweird.f32 %v914
    %vm922 = vmor %vm920, %vm921
    %v923 = vsel %vm922, %v914, %v919
    %v924 = vrsqrt.pop %v746
    %v925 = vmul.f32 %v924, %v746
    %v926 = vmul.f32 %v925, %v924
    %v927 = vmul.f32 0.5, %v926
    %v928 = vsub.f32 1.5, %v927
    %v929 = vmul.f32 %v924, %v928
    %vm930 = vweird.f32 %v746
    %vm931 = vweird.f32 %v924
    %vm932 = vmor %vm930, %vm931
    %v933 = vsel %vm932, %v924, %v929
    %v934 = vrsqrt.pop %v747
    %v935 = vmul.f32 %v934, %v747
    %v936 = vmul.f32 %v935, %v934
    %v937 = vmul.f32 0.5, %v936
    %v938 = vsub.f32 1.5, %v937
    %v939 = vmul.f32 %v934, %v938
    %vm940 = vweird.f32 %v747
    %vm941 = vweird.f32 %v934
    %vm942 = vmor %vm940, %vm941
    %v943 = vsel %vm942, %v934, %v939
    %v944 = vrsqrt.pop %v748
    %v945 = vmul.f32 %v944, %v748
    %v946 = vmul.f32 %v945, %v944
    %v947 = vmul.f32 0.5, %v946
    %v948 = vsub.f32 1.5, %v947
    %v949 = vmul.f32 %v944, %v948
    %vm950 = vweird.f32 %v748
    %vm951 = vweird.f32 %v944
    %vm952 = vmor %vm950, %vm951
    %v953 = vsel %vm952, %v944, %v949
    %v954 = vrsqrt.pop %v749
    %v955 = vmul.f32 %v954, %v749
    %v956 = vmul.f32 %v955, %v954
    %v957 = vmul.f32 0.5, %v956
    %v958 = vsub.f32 1.5, %v957
    %v959 = vmul.f32 %v954, %v958
    %vm960 = vweird.f32 %v749
    %vm961 = vweird.f32 %v954
    %vm962 = vmor %vm960, %vm961
    %v963 = vsel %vm962, %v954, %v959
    %v964 = vrsqrt.pop %v750
    %v965 = vmul.f32 %v964, %v750
    %v966 = vmul.f32 %v965, %v964
    %v967 = vmul.f32 0.5, %v966
    %v968 = vsub.f32 1.5, %v967
    %v969 = vmul.f32 %v964, %v968
    %vm970 = vweird.f32 %v750
    %vm971 = vweird.f32 %v964
    %vm972 = vmor %vm970, %vm971
    %v973 = vsel %vm972, %v964, %v969
    %v974 = vrsqrt.pop %v751
    %v975 = vmul.f32 %v974, %v751
    %v976 = vmul.f32 %v975, %v974
    %v977 = vmul.f32 0.5, %v976
    %v978 = vsub.f32 1.5, %v977
    %v979 = vmul.f32 %v974, %v978
    %vm980 = vweird.f32 %v751
    %vm981 = vweird.f32 %v974
    %vm982 = vmor %vm980, %vm981
    %v983 = vsel %vm982, %v974, %v979
    %v984 = vrsqrt.pop %v752
    %v985 = vmul.f32 %v984, %v752
    %v986 = vmul.f32 %v985, %v984
    %v987 = vmul.f32 0.5, %v986
    %v988 = vsub.f32 1.5, %v987
    %v989 = vmul.f32 %v984, %v988
    %vm990 = vweird.f32 %v752
    %vm991 = vweird.f32 %v984
    %vm992 = vmor %vm990, %vm991
    %v993 = vsel %vm992, %v984, %v989
    %v994 = vrsqrt.pop %v753
    %v995 = vmul.f32 %v994, %v753
    %v996 = vmul.f32 %v995, %v994
    %v997 = vmul.f32 0.5, %v996
    %v998 = vsub.f32 1.5, %v997
    %v999 = vmul.f32 %v994, %v998
    %vm1000 = vweird.f32 %v753
    %vm1001 = vweird.f32 %v994
    %vm1002 = vmor %vm1000, %vm1001
    %v1003 = vsel %vm1002, %v994, %v999
    %v1004 = vld [vmem:[%s2] sm:$0xff]
    %v1005 = vld [vmem:[%s2 + $0x8] sm:$0xff]
    %v1006 = vld [vmem:[%s2 + $0x10] sm:$0xff]
    %v1007 = vld [vmem:[%s2 + $0x18] sm:$0xff]
    %v1008 = vld [vmem:[%s2 + $0x20] sm:$0xff]
    %v1009 = vld [vmem:[%s2 + $0x28] sm:$0xff]
    %v1010 = vld [vmem:[%s2 + $0x30] sm:$0xff]
    %v1011 = vld [vmem:[%s2 + $0x38] sm:$0xff]
    %v1012 = vld [vmem:[%s2 + $0x40] sm:$0xff]
    %v1013 = vld [vmem:[%s2 + $0x48] sm:$0xff]
    %v1014 = vld [vmem:[%s2 + $0x50] sm:$0xff]
    %v1015 = vld [vmem:[%s2 + $0x58] sm:$0xff]
    %v1016 = vld [vmem:[%s2 + $0x60] sm:$0xff]
    %v1017 = vld [vmem:[%s2 + $0x68] sm:$0xff]
    %v1018 = vld [vmem:[%s2 + $0x70] sm:$0xff]
    %v1019 = vld [vmem:[%s2 + $0x78] sm:$0xff]
    %v1020 = vld [vmem:[%s2 + $0x80] sm:$0xff]
    %v1021 = vld [vmem:[%s2 + $0x88] sm:$0xff]
    %v1022 = vld [vmem:[%s2 + $0x90] sm:$0xff]
    %v1023 = vld [vmem:[%s2 + $0x98] sm:$0xff]
    %v1024 = vld [vmem:[%s2 + $0xa0] sm:$0xff]
    %v1025 = vld [vmem:[%s2 + $0xa8] sm:$0xff]
    %v1026 = vld [vmem:[%s2 + $0xb0] sm:$0xff]
    %v1027 = vld [vmem:[%s2 + $0xb8] sm:$0xff]
    %v1028 = vld [vmem:[%s2 + $0xc0] sm:$0xff]
    %v1029 = vmul.f32 %v1004, %v763
    %v1030 = vmul.f32 %v1005, %v773
    %v1031 = vmul.f32 %v1006, %v783
    %v1032 = vmul.f32 %v1007, %v793
    %v1033 = vmul.f32 %v1008, %v803
    %v1034 = vmul.f32 %v1009, %v813
    %v1035 = vmul.f32 %v1010, %v823
    %v1036 = vmul.f32 %v1011, %v833
    %v1037 = vmul.f32 %v1012, %v843
    %v1038 = vmul.f32 %v1013, %v853
    %v1039 = vmul.f32 %v1014, %v863
    %v1040 = vmul.f32 %v1015, %v873
    %v1041 = vmul.f32 %v1016, %v883
    %v1042 = vmul.f32 %v1017, %v893
    %v1043 = vmul.f32 %v1018, %v903
    %v1044 = vmul.f32 %v1019, %v913
    %v1045 = vmul.f32 %v1020, %v923
    %v1046 = vmul.f32 %v1021, %v933
    %v1047 = vmul.f32 %v1022, %v943
    %v1048 = vmul.f32 %v1023, %v953
    %v1049 = vmul.f32 %v1024, %v963
    %v1050 = vmul.f32 %v1025, %v973
    %v1051 = vmul.f32 %v1026, %v983
    %v1052 = vmul.f32 %v1027, %v993
    %v1053 = vmul.f32 %v1028, %v1003
    %v1054 = vld [vmem:[%s3] sm:$0xff]
    %v1055 = vld [vmem:[%s3 + $0x8] sm:$0xff]
    %v1056 = vld [vmem:[%s3 + $0x10] sm:$0xff]
    %v1057 = vld [vmem:[%s3 + $0x18] sm:$0xff]
    %v1058 = vld [vmem:[%s3 + $0x20] sm:$0xff]
    %v1059 = vld [vmem:[%s3 + $0x28] sm:$0xff]
    %v1060 = vld [vmem:[%s3 + $0x30] sm:$0xff]
    %v1061 = vld [vmem:[%s3 + $0x38] sm:$0xff]
    %v1062 = vld [vmem:[%s3 + $0x40] sm:$0xff]
    %v1063 = vld [vmem:[%s3 + $0x48] sm:$0xff]
    %v1064 = vld [vmem:[%s3 + $0x50] sm:$0xff]
    %v1065 = vld [vmem:[%s3 + $0x58] sm:$0xff]
    %v1066 = vld [vmem:[%s3 + $0x60] sm:$0xff]
    %v1067 = vld [vmem:[%s3 + $0x68] sm:$0xff]
    %v1068 = vld [vmem:[%s3 + $0x70] sm:$0xff]
    %v1069 = vld [vmem:[%s3 + $0x78] sm:$0xff]
    %v1070 = vld [vmem:[%s3 + $0x80] sm:$0xff]
    %v1071 = vld [vmem:[%s3 + $0x88] sm:$0xff]
    %v1072 = vld [vmem:[%s3 + $0x90] sm:$0xff]
    %v1073 = vld [vmem:[%s3 + $0x98] sm:$0xff]
    %v1074 = vld [vmem:[%s3 + $0xa0] sm:$0xff]
    %v1075 = vld [vmem:[%s3 + $0xa8] sm:$0xff]
    %v1076 = vld [vmem:[%s3 + $0xb0] sm:$0xff]
    %v1077 = vld [vmem:[%s3 + $0xb8] sm:$0xff]
    %v1078 = vld [vmem:[%s3 + $0xc0] sm:$0xff]
    %v1079 = vmul.f32 %v454, %v1029
    %v1080 = vmul.f32 %v455, %v1030
    %v1081 = vmul.f32 %v456, %v1031
    %v1082 = vmul.f32 %v457, %v1032
    %v1083 = vmul.f32 %v458, %v1033
    %v1084 = vmul.f32 %v459, %v1034
    %v1085 = vmul.f32 %v460, %v1035
    %v1086 = vmul.f32 %v461, %v1036
    %v1087 = vmul.f32 %v462, %v1037
    %v1088 = vmul.f32 %v463, %v1038
    %v1089 = vmul.f32 %v464, %v1039
    %v1090 = vmul.f32 %v465, %v1040
    %v1091 = vmul.f32 %v466, %v1041
    %v1092 = vmul.f32 %v467, %v1042
    %v1093 = vmul.f32 %v468, %v1043
    %v1094 = vmul.f32 %v469, %v1044
    %v1095 = vmul.f32 %v470, %v1045
    %v1096 = vmul.f32 %v471, %v1046
    %v1097 = vmul.f32 %v472, %v1047
    %v1098 = vmul.f32 %v473, %v1048
    %v1099 = vmul.f32 %v474, %v1049
    %v1100 = vmul.f32 %v475, %v1050
    %v1101 = vmul.f32 %v476, %v1051
    %v1102 = vmul.f32 %v477, %v1052
    %v1103 = vmul.f32 %v478, %v1053
    %v1104 = vsub.f32 %v1054, %v1079
    %v1105 = vsub.f32 %v1055, %v1080
    %v1106 = vsub.f32 %v1056, %v1081
    %v1107 = vsub.f32 %v1057, %v1082
    %v1108 = vsub.f32 %v1058, %v1083
    %v1109 = vsub.f32 %v1059, %v1084
    %v1110 = vsub.f32 %v1060, %v1085
    %v1111 = vsub.f32 %v1061, %v1086
    %v1112 = vsub.f32 %v1062, %v1087
    %v1113 = vsub.f32 %v1063, %v1088
    %v1114 = vsub.f32 %v1064, %v1089
    %v1115 = vsub.f32 %v1065, %v1090
    %v1116 = vsub.f32 %v1066, %v1091
    %v1117 = vsub.f32 %v1067, %v1092
    %v1118 = vsub.f32 %v1068, %v1093
    %v1119 = vsub.f32 %v1069, %v1094
    %v1120 = vsub.f32 %v1070, %v1095
    %v1121 = vsub.f32 %v1071, %v1096
    %v1122 = vsub.f32 %v1072, %v1097
    %v1123 = vsub.f32 %v1073, %v1098
    %v1124 = vsub.f32 %v1074, %v1099
    %v1125 = vsub.f32 %v1075, %v1100
    %v1126 = vsub.f32 %v1076, %v1101
    %v1127 = vsub.f32 %v1077, %v1102
    %v1128 = vsub.f32 %v1078, %v1103
    %1130 = vset.pattern.permute.xlu0 0
    %1131 = vperm.xlu0 %1130, %v1029
    %v1132 = vpop.permute.xlu0 %1131
    %1135 = vset.pattern.permute.xlu0 0
    %1136 = vperm.xlu0 %1135, %v1030
    %v1137 = vpop.permute.xlu0 %1136
    %1140 = vset.pattern.permute.xlu0 0
    %1141 = vperm.xlu0 %1140, %v1031
    %v1142 = vpop.permute.xlu0 %1141
    %1145 = vset.pattern.permute.xlu0 0
    %1146 = vperm.xlu0 %1145, %v1032
    %v1147 = vpop.permute.xlu0 %1146
    %1150 = vset.pattern.permute.xlu0 0
    %1151 = vperm.xlu0 %1150, %v1033
    %v1152 = vpop.permute.xlu0 %1151
    %1155 = vset.pattern.permute.xlu0 0
    %1156 = vperm.xlu0 %1155, %v1034
    %v1157 = vpop.permute.xlu0 %1156
    %1160 = vset.pattern.permute.xlu0 0
    %1161 = vperm.xlu0 %1160, %v1035
    %v1162 = vpop.permute.xlu0 %1161
    %1165 = vset.pattern.permute.xlu0 0
    %1166 = vperm.xlu0 %1165, %v1036
    %v1167 = vpop.permute.xlu0 %1166
    %1170 = vset.pattern.permute.xlu0 0
    %1171 = vperm.xlu0 %1170, %v1037
    %v1172 = vpop.permute.xlu0 %1171
    %1175 = vset.pattern.permute.xlu0 0
    %1176 = vperm.xlu0 %1175, %v1038
    %v1177 = vpop.permute.xlu0 %1176
    %1180 = vset.pattern.permute.xlu0 0
    %1181 = vperm.xlu0 %1180, %v1039
    %v1182 = vpop.permute.xlu0 %1181
    %1185 = vset.pattern.permute.xlu0 0
    %1186 = vperm.xlu0 %1185, %v1040
    %v1187 = vpop.permute.xlu0 %1186
    %1190 = vset.pattern.permute.xlu0 0
    %1191 = vperm.xlu0 %1190, %v1041
    %v1192 = vpop.permute.xlu0 %1191
    %1195 = vset.pattern.permute.xlu0 0
    %1196 = vperm.xlu0 %1195, %v1042
    %v1197 = vpop.permute.xlu0 %1196
    %1200 = vset.pattern.permute.xlu0 0
    %1201 = vperm.xlu0 %1200, %v1043
    %v1202 = vpop.permute.xlu0 %1201
    %1205 = vset.pattern.permute.xlu0 0
    %1206 = vperm.xlu0 %1205, %v1044
    %v1207 = vpop.permute.xlu0 %1206
    %1210 = vset.pattern.permute.xlu0 0
    %1211 = vperm.xlu0 %1210, %v1045
    %v1212 = vpop.permute.xlu0 %1211
    %1215 = vset.pattern.permute.xlu0 0
    %1216 = vperm.xlu0 %1215, %v1046
    %v1217 = vpop.permute.xlu0 %1216
    %1220 = vset.pattern.permute.xlu0 0
    %1221 = vperm.xlu0 %1220, %v1047
    %v1222 = vpop.permute.xlu0 %1221
    %1225 = vset.pattern.permute.xlu0 0
    %1226 = vperm.xlu0 %1225, %v1048
    %v1227 = vpop.permute.xlu0 %1226
    %1230 = vset.pattern.permute.xlu0 0
    %1231 = vperm.xlu0 %1230, %v1049
    %v1232 = vpop.permute.xlu0 %1231
    %1235 = vset.pattern.permute.xlu0 0
    %1236 = vperm.xlu0 %1235, %v1050
    %v1237 = vpop.permute.xlu0 %1236
    %1240 = vset.pattern.permute.xlu0 0
    %1241 = vperm.xlu0 %1240, %v1051
    %v1242 = vpop.permute.xlu0 %1241
    %1245 = vset.pattern.permute.xlu0 0
    %1246 = vperm.xlu0 %1245, %v1052
    %v1247 = vpop.permute.xlu0 %1246
    %1250 = vset.pattern.permute.xlu0 0
    %1251 = vperm.xlu0 %1250, %v1053
    %v1252 = vpop.permute.xlu0 %1251
    %v1254 = vmul.f32 %v217, %v1132
    %v1255 = vmul.f32 %v290, %v1132
    %v1256 = vmul.f32 %v219, %v1137
    %v1257 = vmul.f32 %v292, %v1137
    %v1258 = vmul.f32 %v222, %v1142
    %v1259 = vmul.f32 %v295, %v1142
    %v1260 = vmul.f32 %v224, %v1147
    %v1261 = vmul.f32 %v297, %v1147
    %v1262 = vmul.f32 %v227, %v1152
    %v1263 = vmul.f32 %v300, %v1152
    %v1264 = vmul.f32 %v229, %v1157
    %v1265 = vmul.f32 %v302, %v1157
    %v1266 = vmul.f32 %v232, %v1162
    %v1267 = vmul.f32 %v305, %v1162
    %v1268 = vmul.f32 %v234, %v1167
    %v1269 = vmul.f32 %v307, %v1167
    %v1270 = vmul.f32 %v237, %v1172
    %v1271 = vmul.f32 %v310, %v1172
    %v1272 = vmul.f32 %v239, %v1177
    %v1273 = vmul.f32 %v312, %v1177
    %v1274 = vmul.f32 %v242, %v1182
    %v1275 = vmul.f32 %v315, %v1182
    %v1276 = vmul.f32 %v244, %v1187
    %v1277 = vmul.f32 %v317, %v1187
    %v1278 = vmul.f32 %v247, %v1192
    %v1279 = vmul.f32 %v320, %v1192
    %v1280 = vmul.f32 %v249, %v1197
    %v1281 = vmul.f32 %v322, %v1197
    %v1282 = vmul.f32 %v252, %v1202
    %v1283 = vmul.f32 %v325, %v1202
    %v1284 = vmul.f32 %v254, %v1207
    %v1285 = vmul.f32 %v327, %v1207
    %v1286 = vmul.f32 %v257, %v1212
    %v1287 = vmul.f32 %v330, %v1212
    %v1288 = vmul.f32 %v259, %v1217
    %v1289 = vmul.f32 %v332, %v1217
    %v1290 = vmul.f32 %v262, %v1222
    %v1291 = vmul.f32 %v335, %v1222
    %v1292 = vmul.f32 %v264, %v1227
    %v1293 = vmul.f32 %v337, %v1227
    %v1294 = vmul.f32 %v267, %v1232
    %v1295 = vmul.f32 %v340, %v1232
    %v1296 = vmul.f32 %v269, %v1237
    %v1297 = vmul.f32 %v342, %v1237
    %v1298 = vmul.f32 %v272, %v1242
    %v1299 = vmul.f32 %v345, %v1242
    %v1300 = vmul.f32 %v274, %v1247
    %v1301 = vmul.f32 %v347, %v1247
    %v1302 = vmul.f32 %v277, %v1252
    %v1303 = vmul.f32 %v350, %v1252
    %1305 = vset.pattern.permute.xlu0 0
    %1306 = vperm.xlu0 %1305, %v1104
    %v1307 = vpop.permute.xlu0 %1306
    %1310 = vset.pattern.permute.xlu0 0
    %1311 = vperm.xlu0 %1310, %v1105
    %v1312 = vpop.permute.xlu0 %1311
    %1315 = vset.pattern.permute.xlu0 0
    %1316 = vperm.xlu0 %1315, %v1106
    %v1317 = vpop.permute.xlu0 %1316
    %1320 = vset.pattern.permute.xlu0 0
    %1321 = vperm.xlu0 %1320, %v1107
    %v1322 = vpop.permute.xlu0 %1321
    %1325 = vset.pattern.permute.xlu0 0
    %1326 = vperm.xlu0 %1325, %v1108
    %v1327 = vpop.permute.xlu0 %1326
    %1330 = vset.pattern.permute.xlu0 0
    %1331 = vperm.xlu0 %1330, %v1109
    %v1332 = vpop.permute.xlu0 %1331
    %1335 = vset.pattern.permute.xlu0 0
    %1336 = vperm.xlu0 %1335, %v1110
    %v1337 = vpop.permute.xlu0 %1336
    %1340 = vset.pattern.permute.xlu0 0
    %1341 = vperm.xlu0 %1340, %v1111
    %v1342 = vpop.permute.xlu0 %1341
    %1345 = vset.pattern.permute.xlu0 0
    %1346 = vperm.xlu0 %1345, %v1112
    %v1347 = vpop.permute.xlu0 %1346
    %1350 = vset.pattern.permute.xlu0 0
    %1351 = vperm.xlu0 %1350, %v1113
    %v1352 = vpop.permute.xlu0 %1351
    %1355 = vset.pattern.permute.xlu0 0
    %1356 = vperm.xlu0 %1355, %v1114
    %v1357 = vpop.permute.xlu0 %1356
    %1360 = vset.pattern.permute.xlu0 0
    %1361 = vperm.xlu0 %1360, %v1115
    %v1362 = vpop.permute.xlu0 %1361
    %1365 = vset.pattern.permute.xlu0 0
    %1366 = vperm.xlu0 %1365, %v1116
    %v1367 = vpop.permute.xlu0 %1366
    %1370 = vset.pattern.permute.xlu0 0
    %1371 = vperm.xlu0 %1370, %v1117
    %v1372 = vpop.permute.xlu0 %1371
    %1375 = vset.pattern.permute.xlu0 0
    %1376 = vperm.xlu0 %1375, %v1118
    %v1377 = vpop.permute.xlu0 %1376
    %1380 = vset.pattern.permute.xlu0 0
    %1381 = vperm.xlu0 %1380, %v1119
    %v1382 = vpop.permute.xlu0 %1381
    %1385 = vset.pattern.permute.xlu0 0
    %1386 = vperm.xlu0 %1385, %v1120
    %v1387 = vpop.permute.xlu0 %1386
    %1390 = vset.pattern.permute.xlu0 0
    %1391 = vperm.xlu0 %1390, %v1121
    %v1392 = vpop.permute.xlu0 %1391
    %1395 = vset.pattern.permute.xlu0 0
    %1396 = vperm.xlu0 %1395, %v1122
    %v1397 = vpop.permute.xlu0 %1396
    %1400 = vset.pattern.permute.xlu0 0
    %1401 = vperm.xlu0 %1400, %v1123
    %v1402 = vpop.permute.xlu0 %1401
    %1405 = vset.pattern.permute.xlu0 0
    %1406 = vperm.xlu0 %1405, %v1124
    %v1407 = vpop.permute.xlu0 %1406
    %1410 = vset.pattern.permute.xlu0 0
    %1411 = vperm.xlu0 %1410, %v1125
    %v1412 = vpop.permute.xlu0 %1411
    %1415 = vset.pattern.permute.xlu0 0
    %1416 = vperm.xlu0 %1415, %v1126
    %v1417 = vpop.permute.xlu0 %1416
    %1420 = vset.pattern.permute.xlu0 0
    %1421 = vperm.xlu0 %1420, %v1127
    %v1422 = vpop.permute.xlu0 %1421
    %1425 = vset.pattern.permute.xlu0 0
    %1426 = vperm.xlu0 %1425, %v1128
    %v1427 = vpop.permute.xlu0 %1426
    %v1429 = vadd.f32 %v1254, %v1307
    %v1430 = vadd.f32 %v1255, %v1307
    %v1431 = vadd.f32 %v1256, %v1312
    %v1432 = vadd.f32 %v1257, %v1312
    %v1433 = vadd.f32 %v1258, %v1317
    %v1434 = vadd.f32 %v1259, %v1317
    %v1435 = vadd.f32 %v1260, %v1322
    %v1436 = vadd.f32 %v1261, %v1322
    %v1437 = vadd.f32 %v1262, %v1327
    %v1438 = vadd.f32 %v1263, %v1327
    %v1439 = vadd.f32 %v1264, %v1332
    %v1440 = vadd.f32 %v1265, %v1332
    %v1441 = vadd.f32 %v1266, %v1337
    %v1442 = vadd.f32 %v1267, %v1337
    %v1443 = vadd.f32 %v1268, %v1342
    %v1444 = vadd.f32 %v1269, %v1342
    %v1445 = vadd.f32 %v1270, %v1347
    %v1446 = vadd.f32 %v1271, %v1347
    %v1447 = vadd.f32 %v1272, %v1352
    %v1448 = vadd.f32 %v1273, %v1352
    %v1449 = vadd.f32 %v1274, %v1357
    %v1450 = vadd.f32 %v1275, %v1357
    %v1451 = vadd.f32 %v1276, %v1362
    %v1452 = vadd.f32 %v1277, %v1362
    %v1453 = vadd.f32 %v1278, %v1367
    %v1454 = vadd.f32 %v1279, %v1367
    %v1455 = vadd.f32 %v1280, %v1372
    %v1456 = vadd.f32 %v1281, %v1372
    %v1457 = vadd.f32 %v1282, %v1377
    %v1458 = vadd.f32 %v1283, %v1377
    %v1459 = vadd.f32 %v1284, %v1382
    %v1460 = vadd.f32 %v1285, %v1382
    %v1461 = vadd.f32 %v1286, %v1387
    %v1462 = vadd.f32 %v1287, %v1387
    %v1463 = vadd.f32 %v1288, %v1392
    %v1464 = vadd.f32 %v1289, %v1392
    %v1465 = vadd.f32 %v1290, %v1397
    %v1466 = vadd.f32 %v1291, %v1397
    %v1467 = vadd.f32 %v1292, %v1402
    %v1468 = vadd.f32 %v1293, %v1402
    %v1469 = vadd.f32 %v1294, %v1407
    %v1470 = vadd.f32 %v1295, %v1407
    %v1471 = vadd.f32 %v1296, %v1412
    %v1472 = vadd.f32 %v1297, %v1412
    %v1473 = vadd.f32 %v1298, %v1417
    %v1474 = vadd.f32 %v1299, %v1417
    %v1475 = vadd.f32 %v1300, %v1422
    %v1476 = vadd.f32 %v1301, %v1422
    %v1477 = vadd.f32 %v1302, %v1427
    %v1478 = vadd.f32 %v1303, %v1427
    %1479 = vst [vmem:[#allocation2] sm:$0xff] %v1429
    %1480 = vst.msk [vmem:[#allocation2 + $0x8] sm:$0xff] %vm353, %v1430
    %1481 = vst [vmem:[#allocation2 + $0x10] sm:$0xff] %v1431
    %1482 = vst.msk [vmem:[#allocation2 + $0x18] sm:$0xff] %vm353, %v1432
    %1483 = vst [vmem:[#allocation2 + $0x20] sm:$0xff] %v1433
    %1484 = vst.msk [vmem:[#allocation2 + $0x28] sm:$0xff] %vm353, %v1434
    %1485 = vst [vmem:[#allocation2 + $0x30] sm:$0xff] %v1435
    %1486 = vst.msk [vmem:[#allocation2 + $0x38] sm:$0xff] %vm353, %v1436
    %1487 = vst [vmem:[#allocation2 + $0x40] sm:$0xff] %v1437
    %1488 = vst.msk [vmem:[#allocation2 + $0x48] sm:$0xff] %vm353, %v1438
    %1489 = vst [vmem:[#allocation2 + $0x50] sm:$0xff] %v1439
    %1490 = vst.msk [vmem:[#allocation2 + $0x58] sm:$0xff] %vm353, %v1440
    %1491 = vst [vmem:[#allocation2 + $0x60] sm:$0xff] %v1441
    %1492 = vst.msk [vmem:[#allocation2 + $0x68] sm:$0xff] %vm353, %v1442
    %1493 = vst [vmem:[#allocation2 + $0x70] sm:$0xff] %v1443
    %1494 = vst.msk [vmem:[#allocation2 + $0x78] sm:$0xff] %vm353, %v1444
    %1495 = vst [vmem:[#allocation2 + $0x80] sm:$0xff] %v1445
    %1496 = vst.msk [vmem:[#allocation2 + $0x88] sm:$0xff] %vm353, %v1446
    %1497 = vst [vmem:[#allocation2 + $0x90] sm:$0xff] %v1447
    %1498 = vst.msk [vmem:[#allocation2 + $0x98] sm:$0xff] %vm353, %v1448
    %1499 = vst [vmem:[#allocation2 + $0xa0] sm:$0xff] %v1449
    %1500 = vst.msk [vmem:[#allocation2 + $0xa8] sm:$0xff] %vm353, %v1450
    %1501 = vst [vmem:[#allocation2 + $0xb0] sm:$0xff] %v1451
    %1502 = vst.msk [vmem:[#allocation2 + $0xb8] sm:$0xff] %vm353, %v1452
    %1503 = vst [vmem:[#allocation2 + $0xc0] sm:$0xff] %v1453
    %1504 = vst.msk [vmem:[#allocation2 + $0xc8] sm:$0xff] %vm353, %v1454
    %1505 = vst [vmem:[#allocation2 + $0xd0] sm:$0xff] %v1455
    %1506 = vst.msk [vmem:[#allocation2 + $0xd8] sm:$0xff] %vm353, %v1456
    %1507 = vst [vmem:[#allocation2 + $0xe0] sm:$0xff] %v1457
    %1508 = vst.msk [vmem:[#allocation2 + $0xe8] sm:$0xff] %vm353, %v1458
    %1509 = vst [vmem:[#allocation2 + $0xf0] sm:$0xff] %v1459
    %1510 = vst.msk [vmem:[#allocation2 + $0xf8] sm:$0xff] %vm353, %v1460
    %1511 = vst [vmem:[#allocation2 + $0x100] sm:$0xff] %v1461
    %1512 = vst.msk [vmem:[#allocation2 + $0x108] sm:$0xff] %vm353, %v1462
    %1513 = vst [vmem:[#allocation2 + $0x110] sm:$0xff] %v1463
    %1514 = vst.msk [vmem:[#allocation2 + $0x118] sm:$0xff] %vm353, %v1464
    %1515 = vst [vmem:[#allocation2 + $0x120] sm:$0xff] %v1465
    %1516 = vst.msk [vmem:[#allocation2 + $0x128] sm:$0xff] %vm353, %v1466
    %1517 = vst [vmem:[#allocation2 + $0x130] sm:$0xff] %v1467
    %1518 = vst.msk [vmem:[#allocation2 + $0x138] sm:$0xff] %vm353, %v1468
    %1519 = vst [vmem:[#allocation2 + $0x140] sm:$0xff] %v1469
    %1520 = vst.msk [vmem:[#allocation2 + $0x148] sm:$0xff] %vm353, %v1470
    %1521 = vst [vmem:[#allocation2 + $0x150] sm:$0xff] %v1471
    %1522 = vst.msk [vmem:[#allocation2 + $0x158] sm:$0xff] %vm353, %v1472
    %1523 = vst [vmem:[#allocation2 + $0x160] sm:$0xff] %v1473
    %1524 = vst.msk [vmem:[#allocation2 + $0x168] sm:$0xff] %vm353, %v1474
    %1525 = vst [vmem:[#allocation2 + $0x170] sm:$0xff] %v1475
    %1526 = vst.msk [vmem:[#allocation2 + $0x178] sm:$0xff] %vm353, %v1476
    %1527 = vst [vmem:[#allocation2 + $0x180] sm:$0xff] %v1477
    %1528 = vst.msk [vmem:[#allocation2 + $0x188] sm:$0xff] %vm353, %v1478
    // Predicated region
    $region18: #{tpu_custom_call.1} parent=1 // pred_check
      _
    $region19: #{tpu_custom_call.1} parent=1 // pred_check_branch
      %1530 = sbr.rel (0) target = $region21
    $region20: #{tpu_custom_call.1} parent=1 // pred_region
      %1532 = vsyncadd [#allocation3], 0
      %s1533 = sshll.u32 [#allocation2], 4
      %s1534 = int_to_ptr.vmem [resolvable:$true] %s1533
      %s1535 = sshll.u32 %s4, 4
      %s1536 = int_to_ptr.hbm [resolvable:$true] %s1535
      %1541 = dma.vmem_to_hbm [thread:$0]  %s1534, 6400, %s1536, [#allocation3], 256, 256, 16
    $region21: #{tpu_custom_call.1} parent=1 // pred_fallthru
      _
    // Predicated region
    $region22: #{tpu_custom_call.1} parent=1 // pred_check
      _
    $region23: #{tpu_custom_call.1} parent=1 // pred_check_branch
      %1543 = sbr.rel (0) target = $region25
    $region24: #{tpu_custom_call.1} parent=1 // pred_region
      %1545 = dma.done [#allocation3], 6400
    $region25: #{tpu_custom_call.1} parent=1 // pred_fallthru
      _
    %1546 = vsyncpa [#allocation3], 1

</llo_original>
